<compile_context>
chip_gen: v5e
topology: v5e:2x2
jax: 0.10.0
libtpu: 0.0.40
codegen_flags: <defaults>
</compile_context>

<pallas_src>
import functools

import jax
import jax.numpy as jnp
from jax import lax
from jax.experimental import pallas as pl
from jax.experimental.pallas import tpu as pltpu

NEG_RATIO = 3.0
EPS = 1e-6
LANES = 128
DEFAULT_ROW_TILE = 512            # (512,128) f32 tile = 256 KiB per stream
MAX_LOSS_BITS = 0x42C80001        # f32 bits just above 100.0 (max possible BCE loss)
N_BISECT = 32                     # enough to resolve any bit pattern in [0, MAX_LOSS_BITS]


def _fold8(x):
    """(R,128) -> (8,128) partial sums: pure VALU adds, no cross-lane reduce."""
    return jnp.sum(x.reshape(-1, 8, LANES), axis=0)


def _bce_stats_kernel(pred_ref, gt_ref, mask_ref, negloss_ref, part_ref):
    """BCE loss + masking.  Emits negative-loss tile + per-block vector partials."""
    pred = pred_ref[...]
    gt = gt_ref[...]
    mask = mask_ref[...]

    # torch .byte() truncation on [0,1]-valued products == floor
    positive = jnp.floor(gt * mask)
    negative = jnp.floor((1.0 - gt) * mask)

    # torch F.binary_cross_entropy clamps log terms at -100
    log_p = jnp.maximum(jnp.log(pred), -100.0)
    log_1mp = jnp.maximum(jnp.log(1.0 - pred), -100.0)
    loss = -(gt * log_p + (1.0 - gt) * log_1mp)
    negloss = loss * negative

    negloss_ref[...] = negloss
    # Per-block (8,128) partials; cross-block + cross-lane reduction happens
    # outside on a tiny array, so the grid axis can stay "parallel".
    part_ref[0, 0] = _fold8(loss * positive)   # positive loss sum
    part_ref[0, 1] = _fold8(positive)          # positive count
    part_ref[0, 2] = _fold8(negative)          # negative count
    part_ref[0, 3] = _fold8(negloss)           # total negative-loss sum


def _count_sum_ge_kernel(thr_ref, negloss_ref, out_ref, cnt_acc, sum_acc):
    """count(x >= thr) and sum(x >= thr) over the slab, tiled with VMEM accumulators."""
    i = pl.program_id(0)

    @pl.when(i == 0)
    def _():
        cnt_acc[...] = jnp.zeros_like(cnt_acc)
        sum_acc[...] = jnp.zeros_like(sum_acc)

    x = negloss_ref[...]
    # negloss >= 0, so comparing int32 bit patterns == comparing the f32 values.
    ge = pltpu.bitcast(x, jnp.int32) >= thr_ref[0]
    cnt_acc[...] += _fold8(jnp.where(ge, 1.0, 0.0))
    sum_acc[...] += _fold8(jnp.where(ge, x, 0.0))

    @pl.when(i == pl.num_programs(0) - 1)
    def _():
        out_ref[0] = jnp.sum(cnt_acc[...])
        out_ref[1] = jnp.sum(sum_acc[...])


def balance_cross_entropy_loss(pred, gt, mask, negative_ratio=NEG_RATIO, eps=EPS,
                               row_tile=DEFAULT_ROW_TILE):
    """pred, gt: (N, 1, H, W); mask: (N, H, W).  Returns a scalar (f32)."""
    n, c, h, w = pred.shape
    assert c == 1
    assert row_tile % 8 == 0
    l = n * h * w
    rows_raw = pl.cdiv(l, LANES)
    tile_r = min(row_tile, ((rows_raw + 7) // 8) * 8)
    rows = ((rows_raw + tile_r - 1) // tile_r) * tile_r
    l_pad = rows * LANES
    grid = rows // tile_r

    def prep(x, fill):
        x = x.reshape(-1)
        if x.dtype != jnp.float32:
            x = x.astype(jnp.float32)
        if l_pad != l:                       # skip the pad copy when not needed
            x = jnp.pad(x, (0, l_pad - l), constant_values=fill)
        return x.reshape(rows, LANES)

    # Padding: pred=0.5 (finite logs), gt=0, mask=0 -> positive=negative=0 and
    # negloss=0, so padded elements never affect any sum or the top-k result.
    pred2 = prep(pred[:, 0], 0.5)
    gt2 = prep(gt[:, 0], 0.0)
    mask2 = prep(mask, 0.0)

    negloss, partials = pl.pallas_call(
        _bce_stats_kernel,
        out_shape=(
            jax.ShapeDtypeStruct((rows, LANES), jnp.float32),
            jax.ShapeDtypeStruct((grid, 4, 8, LANES), jnp.float32),
        ),
        grid_spec=pltpu.PrefetchScalarGridSpec(
            num_scalar_prefetch=0,
            grid=(grid,),
            in_specs=[
                pl.BlockSpec((tile_r, LANES), lambda i: (i, 0)),
                pl.BlockSpec((tile_r, LANES), lambda i: (i, 0)),
                pl.BlockSpec((tile_r, LANES), lambda i: (i, 0)),
            ],
            out_specs=(
                pl.BlockSpec((tile_r, LANES), lambda i: (i, 0)),
                pl.BlockSpec((1, 4, 8, LANES), lambda i: (i, 0, 0, 0)),
            ),
        ),
        compiler_params=pltpu.CompilerParams(
            dimension_semantics=("parallel",)),
    )(pred2, gt2, mask2)

    sums = jnp.sum(partials, axis=(0, 2, 3))              # (4,)
    pos_loss_sum = sums[0]
    pos_count = sums[1]
    neg_total = sums[2]
    negloss_total = sums[3]
    # int() truncation in torch == floor for non-negative integral floats
    neg_count = jnp.minimum(neg_total, jnp.floor(pos_count * negative_ratio))
    k_f = neg_count

    count_pass = pl.pallas_call(
        _count_sum_ge_kernel,
        out_shape=jax.ShapeDtypeStruct((2,), jnp.float32),
        grid_spec=pltpu.PrefetchScalarGridSpec(
            num_scalar_prefetch=1,
            grid=(grid,),
            in_specs=[pl.BlockSpec((tile_r, LANES), lambda i, thr: (i, 0))],
            out_specs=pl.BlockSpec(memory_space=pltpu.MemorySpace.SMEM),
            scratch_shapes=[pltpu.VMEM((8, LANES), jnp.float32),
                            pltpu.VMEM((8, LANES), jnp.float32)],
        ),
        compiler_params=pltpu.CompilerParams(
            dimension_semantics=("arbitrary",)),
    )

    # Exact top-k sum without a global sort: bisect the k-th largest value over
    # f32 bit patterns.  Invariant: count(x >= float(lo)) >= k.
    def bisect_body(_, carry):
        lo, hi, cnt_lo, sum_lo = carry
        mid = lo + (hi - lo) // 2
        cs = count_pass(jnp.reshape(mid, (1,)), negloss)
        cnt, s = cs[0], cs[1]
        take = cnt >= k_f
        lo = jnp.where(take, mid, lo)
        hi = jnp.where(take, hi, mid)
        cnt_lo = jnp.where(take, cnt, cnt_lo)
        sum_lo = jnp.where(take, s, sum_lo)
        return lo, hi, cnt_lo, sum_lo

    init = (jnp.int32(0), jnp.int32(MAX_LOSS_BITS),
            jnp.float32(l_pad), negloss_total)
    lo, _, cnt_lo, sum_lo = lax.fori_loop(0, N_BISECT, bisect_body, init)
    t = lax.bitcast_convert_type(lo, jnp.float32)
    # Tie-correct top-k sum: sum over x>=t minus the excess tied copies of t.
    topk_sum = sum_lo + (k_f - cnt_lo) * t

    balance_loss = (pos_loss_sum + topk_sum) / (pos_count + neg_count + eps)
    return balance_loss


def _reference(pred, gt, mask, negative_ratio=NEG_RATIO, eps=EPS):
    p = pred[:, 0]
    g = gt[:, 0]
    positive = jnp.floor(g * mask)
    negative = jnp.floor((1.0 - g) * mask)
    pos_count = jnp.sum(positive)
    neg_total = jnp.sum(negative)
    neg_count = jnp.minimum(neg_total, jnp.floor(pos_count * negative_ratio))
    log_p = jnp.maximum(jnp.log(p), -100.0)
    log_1mp = jnp.maximum(jnp.log(1.0 - p), -100.0)
    loss = -(g * log_p + (1.0 - g) * log_1mp)
    pos_loss = jnp.sum(loss * positive)
    neg_loss = (loss * negative).reshape(-1)
    sorted_desc = jnp.sort(neg_loss)[::-1]
    idx = jnp.arange(sorted_desc.shape[0])
    topk = jnp.sum(jnp.where(idx < neg_count, sorted_desc, 0.0))
    return (pos_loss + topk) / (pos_count + neg_count + eps)


if __name__ == "__main__":
    # Test 1: small shape, single grid step, default tile.
    key = jax.random.PRNGKey(0)
    k1, k2, k3 = jax.random.split(key, 3)
    N, H, W = 2, 16, 16
    pred = jax.nn.sigmoid(jax.random.normal(k1, (N, 1, H, W), jnp.float32))
    gt = jax.random.bernoulli(k2, 0.3, (N, 1, H, W)).astype(jnp.float32)
    mask = jax.random.bernoulli(k3, 0.8, (N, H, W)).astype(jnp.float32)

    out = jax.jit(balance_cross_entropy_loss)(pred, gt, mask)
    jax.block_until_ready(out)
    ref = _reference(pred, gt, mask)
    assert jnp.allclose(out, ref, rtol=1e-4, atol=1e-5), (out, ref)

    # Test 2: force a small row tile so the multi-step grid / cross-step
    # accumulation paths are exercised.
    k4, k5, k6 = jax.random.split(jax.random.PRNGKey(1), 3)
    N2, H2, W2 = 2, 32, 32
    pred_b = jax.nn.sigmoid(jax.random.normal(k4, (N2, 1, H2, W2), jnp.float32))
    gt_b = jax.random.bernoulli(k5, 0.3, (N2, 1, H2, W2)).astype(jnp.float32)
    mask_b = jax.random.bernoulli(k6, 0.8, (N2, H2, W2)).astype(jnp.float32)

    f_small_tile = jax.jit(functools.partial(balance_cross_entropy_loss, row_tile=8))
    out_b = f_small_tile(pred_b, gt_b, mask_b)
    jax.block_until_ready(out_b)
    ref_b = _reference(pred_b, gt_b, mask_b)
    assert jnp.allclose(out_b, ref_b, rtol=1e-4, atol=1e-5), (out_b, ref_b)

    print("KERNEL_OK")
</pallas_src>

<mosaic_0001>
module attributes {stable_mosaic.version = 11 : i64} {
  func.func @_count_sum_ge_kernel(%arg0: i32, %arg1: memref<1xi32, #tpu.memory_space<smem>>, %arg2: memref<8x128xf32, #tpu.memory_space<vmem>>, %arg3: memref<2xf32, #tpu.memory_space<smem>>, %arg4: memref<8x128xf32, #tpu.memory_space<vmem>>, %arg5: memref<8x128xf32, #tpu.memory_space<vmem>>) attributes {dimension_semantics = [#tpu.dimension_semantics<arbitrary>], iteration_bounds = array<i64: 1>, scalar_prefetch = 1 : i64, scratch_operands = 2 : i64, tpu.core_type = #tpu.core_type<tc>, window_params = [{transform_indices = @transform_0, window_bounds = array<i64: 8, 128>}, {transform_indices = @transform_1, window_bounds = array<i64: 2>}]} {
    %c0_i32 = arith.constant 0 : i32
    %0 = arith.cmpi eq, %arg0, %c0_i32 : i32
    %1 = arith.extui %0 : i1 to i32
    %c0_i32_0 = arith.constant 0 : i32
    %2 = arith.cmpi ne, %1, %c0_i32_0 : i32
    scf.if %2 {
      %cst_17 = arith.constant 0.000000e+00 : f32
      %26 = vector.broadcast %cst_17 : f32 to vector<8x128xf32>
      %c0_18 = arith.constant 0 : index
      %c0_19 = arith.constant 0 : index
      %27 = vector.load %arg4[%c0_18, %c0_19] : memref<8x128xf32, #tpu.memory_space<vmem>>, vector<8x128xf32>
      tpu.vector_store %arg4[%c0_18, %c0_19], %26 {strides = array<i32>} : memref<8x128xf32, #tpu.memory_space<vmem>>, vector<8x128xf32>,
      %cst_20 = arith.constant 0.000000e+00 : f32
      %28 = vector.broadcast %cst_20 : f32 to vector<8x128xf32>
      %c0_21 = arith.constant 0 : index
      %c0_22 = arith.constant 0 : index
      %29 = vector.load %arg5[%c0_21, %c0_22] : memref<8x128xf32, #tpu.memory_space<vmem>>, vector<8x128xf32>
      tpu.vector_store %arg5[%c0_21, %c0_22], %28 {strides = array<i32>} : memref<8x128xf32, #tpu.memory_space<vmem>>, vector<8x128xf32>,
    } else {
    }
    %c0 = arith.constant 0 : index
    %c0_1 = arith.constant 0 : index
    %3 = vector.load %arg2[%c0, %c0_1] : memref<8x128xf32, #tpu.memory_space<vmem>>, vector<8x128xf32>
    %4 = tpu.bitcast %3 : vector<8x128xf32> -> vector<8x128xi32>
    %c0_2 = arith.constant 0 : index
    %5 = memref.load %arg1[%c0_2] : memref<1xi32, #tpu.memory_space<smem>>
    %6 = vector.broadcast %5 : i32 to vector<8x128xi32>
    %7 = arith.cmpi sge, %4, %6 : vector<8x128xi32>
    %c0_3 = arith.constant 0 : index
    %c0_4 = arith.constant 0 : index
    %8 = vector.load %arg4[%c0_3, %c0_4] : memref<8x128xf32, #tpu.memory_space<vmem>>, vector<8x128xf32>
    %cst = arith.constant 1.000000e+00 : f32
    %cst_5 = arith.constant 0.000000e+00 : f32
    %9 = vector.broadcast %cst : f32 to vector<8x128xf32>
    %10 = vector.broadcast %cst_5 : f32 to vector<8x128xf32>
    %11 = arith.select %7, %9, %10 : vector<8x128xi1>, vector<8x128xf32>
    %12 = vector.shape_cast %11 : vector<8x128xf32> to vector<1x8x128xf32>
    %cst_6 = arith.constant dense<0.000000e+00> : vector<8x128xf32>
    %13 = vector.multi_reduction <add>, %12, %cst_6 [0] : vector<1x8x128xf32> to vector<8x128xf32>
    %14 = arith.addf %8, %13 : vector<8x128xf32>
    %c0_7 = arith.constant 0 : index
    %c0_8 = arith.constant 0 : index
    %15 = vector.load %arg4[%c0_7, %c0_8] : memref<8x128xf32, #tpu.memory_space<vmem>>, vector<8x128xf32>
    tpu.vector_store %arg4[%c0_7, %c0_8], %14 {strides = array<i32>} : memref<8x128xf32, #tpu.memory_space<vmem>>, vector<8x128xf32>,
    %c0_9 = arith.constant 0 : index
    %c0_10 = arith.constant 0 : index
    %16 = vector.load %arg5[%c0_9, %c0_10] : memref<8x128xf32, #tpu.memory_space<vmem>>, vector<8x128xf32>
    %cst_11 = arith.constant 0.000000e+00 : f32
    %17 = vector.broadcast %cst_11 : f32 to vector<8x128xf32>
    %18 = arith.select %7, %3, %17 : vector<8x128xi1>, vector<8x128xf32>
    %19 = vector.shape_cast %18 : vector<8x128xf32> to vector<1x8x128xf32>
    %cst_12 = arith.constant dense<0.000000e+00> : vector<8x128xf32>
    %20 = vector.multi_reduction <add>, %19, %cst_12 [0] : vector<1x8x128xf32> to vector<8x128xf32>
    %21 = arith.addf %16, %20 : vector<8x128xf32>
    %c0_13 = arith.constant 0 : index
    %c0_14 = arith.constant 0 : index
    %22 = vector.load %arg5[%c0_13, %c0_14] : memref<8x128xf32, #tpu.memory_space<vmem>>, vector<8x128xf32>
    tpu.vector_store %arg5[%c0_13, %c0_14], %21 {strides = array<i32>} : memref<8x128xf32, #tpu.memory_space<vmem>>, vector<8x128xf32>,
    %c0_i32_15 = arith.constant 0 : i32
    %23 = arith.cmpi eq, %arg0, %c0_i32_15 : i32
    %24 = arith.extui %23 : i1 to i32
    %c0_i32_16 = arith.constant 0 : i32
    %25 = arith.cmpi ne, %24, %c0_i32_16 : i32
    scf.if %25 {
      %c0_17 = arith.constant 0 : index
      %c0_18 = arith.constant 0 : index
      %26 = vector.load %arg4[%c0_17, %c0_18] : memref<8x128xf32, #tpu.memory_space<vmem>>, vector<8x128xf32>
      %27 = vector.shape_cast %26 : vector<8x128xf32> to vector<1x8x128xf32>
      %cst_19 = arith.constant dense<0.000000e+00> : vector<1xf32>
      %28 = vector.multi_reduction <add>, %27, %cst_19 [1, 2] : vector<1x8x128xf32> to vector<1xf32>
      %29 = vector.shape_cast %28 : vector<1xf32> to vector<1x1x1xf32>
      %30 = vector.extract %29[0, 0, 0] : f32 from vector<1x1x1xf32>
      %c0_20 = arith.constant 0 : index
      %31 = memref.load %arg3[%c0_20] : memref<2xf32, #tpu.memory_space<smem>>
      memref.store %30, %arg3[%c0_20] : memref<2xf32, #tpu.memory_space<smem>>
      %c0_21 = arith.constant 0 : index
      %c0_22 = arith.constant 0 : index
      %32 = vector.load %arg5[%c0_21, %c0_22] : memref<8x128xf32, #tpu.memory_space<vmem>>, vector<8x128xf32>
      %33 = vector.shape_cast %32 : vector<8x128xf32> to vector<1x8x128xf32>
      %cst_23 = arith.constant dense<0.000000e+00> : vector<1xf32>
      %34 = vector.multi_reduction <add>, %33, %cst_23 [1, 2] : vector<1x8x128xf32> to vector<1xf32>
      %35 = vector.shape_cast %34 : vector<1xf32> to vector<1x1x1xf32>
      %36 = vector.extract %35[0, 0, 0] : f32 from vector<1x1x1xf32>
      %c1 = arith.constant 1 : index
      %37 = memref.load %arg3[%c1] : memref<2xf32, #tpu.memory_space<smem>>
      memref.store %36, %arg3[%c1] : memref<2xf32, #tpu.memory_space<smem>>
    } else {
    }
    return
  }
  func.func @transform_0(%arg0: i32, %arg1: memref<1xi32, #tpu.memory_space<smem>>) -> (i32, i32) {
    %c0_i32 = arith.constant 0 : i32
    %c0_i32_0 = arith.constant 0 : i32
    return %arg0, %c0_i32 : i32, i32
  }
  func.func @transform_1(%arg0: i32, %arg1: memref<1xi32, #tpu.memory_space<smem>>) -> i32 {
    %c0_i32 = arith.constant 0 : i32
    %c0_i32_0 = arith.constant 0 : i32
    return %c0_i32 : i32
  }
}

module attributes {stable_mosaic.version = 11 : i64} {
  func.func @_bce_stats_kernel(%arg0: i32, %arg1: memref<8x128xf32, #tpu.memory_space<vmem>>, %arg2: memref<8x128xf32, #tpu.memory_space<vmem>>, %arg3: memref<8x128xf32, #tpu.memory_space<vmem>>, %arg4: memref<8x128xf32, #tpu.memory_space<vmem>>, %arg5: memref<1x4x8x128xf32, #tpu.memory_space<vmem>>) attributes {dimension_semantics = [#tpu.dimension_semantics<parallel>], iteration_bounds = array<i64: 1>, scalar_prefetch = 0 : i64, scratch_operands = 0 : i64, tpu.core_type = #tpu.core_type<tc>, window_params = [{transform_indices = @transform_0, window_bounds = array<i64: 8, 128>}, {transform_indices = @transform_1, window_bounds = array<i64: 8, 128>}, {transform_indices = @transform_2, window_bounds = array<i64: 8, 128>}, {transform_indices = @transform_3, window_bounds = array<i64: 8, 128>}, {transform_indices = @transform_4, window_bounds = array<i64: 1, 4, 8, 128>}]} {
    %c0 = arith.constant 0 : index
    %c0_0 = arith.constant 0 : index
    %0 = vector.load %arg1[%c0, %c0_0] : memref<8x128xf32, #tpu.memory_space<vmem>>, vector<8x128xf32>
    %c0_1 = arith.constant 0 : index
    %c0_2 = arith.constant 0 : index
    %1 = vector.load %arg2[%c0_1, %c0_2] : memref<8x128xf32, #tpu.memory_space<vmem>>, vector<8x128xf32>
    %c0_3 = arith.constant 0 : index
    %c0_4 = arith.constant 0 : index
    %2 = vector.load %arg3[%c0_3, %c0_4] : memref<8x128xf32, #tpu.memory_space<vmem>>, vector<8x128xf32>
    %3 = arith.mulf %1, %2 : vector<8x128xf32>
    %4 = math.floor %3 : vector<8x128xf32>
    %cst = arith.constant 1.000000e+00 : f32
    %5 = vector.broadcast %cst : f32 to vector<8x128xf32>
    %6 = arith.subf %5, %1 : vector<8x128xf32>
    %7 = arith.mulf %6, %2 : vector<8x128xf32>
    %8 = math.floor %7 : vector<8x128xf32>
    %9 = math.log %0 : vector<8x128xf32>
    %cst_5 = arith.constant -1.000000e+02 : f32
    %10 = vector.broadcast %cst_5 : f32 to vector<8x128xf32>
    %11 = arith.maximumf %9, %10 : vector<8x128xf32>
    %cst_6 = arith.constant 1.000000e+00 : f32
    %12 = vector.broadcast %cst_6 : f32 to vector<8x128xf32>
    %13 = arith.subf %12, %0 : vector<8x128xf32>
    %14 = math.log %13 : vector<8x128xf32>
    %cst_7 = arith.constant -1.000000e+02 : f32
    %15 = vector.broadcast %cst_7 : f32 to vector<8x128xf32>
    %16 = arith.maximumf %14, %15 : vector<8x128xf32>
    %17 = arith.mulf %1, %11 : vector<8x128xf32>
    %cst_8 = arith.constant 1.000000e+00 : f32
    %18 = vector.broadcast %cst_8 : f32 to vector<8x128xf32>
    %19 = arith.subf %18, %1 : vector<8x128xf32>
    %20 = arith.mulf %19, %16 : vector<8x128xf32>
    %21 = arith.addf %17, %20 : vector<8x128xf32>
    %cst_9 = arith.constant 0.000000e+00 : f32
    %22 = vector.broadcast %cst_9 : f32 to vector<8x128xf32>
    %23 = arith.subf %22, %21 : vector<8x128xf32>
    %24 = arith.mulf %23, %8 : vector<8x128xf32>
    %c0_10 = arith.constant 0 : index
    %c0_11 = arith.constant 0 : index
    %25 = vector.load %arg4[%c0_10, %c0_11] : memref<8x128xf32, #tpu.memory_space<vmem>>, vector<8x128xf32>
    tpu.vector_store %arg4[%c0_10, %c0_11], %24 {strides = array<i32>} : memref<8x128xf32, #tpu.memory_space<vmem>>, vector<8x128xf32>,
    %26 = arith.mulf %23, %4 : vector<8x128xf32>
    %27 = vector.shape_cast %26 : vector<8x128xf32> to vector<1x8x128xf32>
    %cst_12 = arith.constant dense<0.000000e+00> : vector<8x128xf32>
    %28 = vector.multi_reduction <add>, %27, %cst_12 [0] : vector<1x8x128xf32> to vector<8x128xf32>
    %c0_13 = arith.constant 0 : index
    %c0_14 = arith.constant 0 : index
    %c0_15 = arith.constant 0 : index
    %c0_16 = arith.constant 0 : index
    %29 = vector.load %arg5[%c0_13, %c0_14, %c0_15, %c0_16] : memref<1x4x8x128xf32, #tpu.memory_space<vmem>>, vector<1x1x8x128xf32>
    %30 = vector.shape_cast %29 : vector<1x1x8x128xf32> to vector<8x128xf32>
    %31 = vector.shape_cast %28 : vector<8x128xf32> to vector<1x1x8x128xf32>
    tpu.vector_store %arg5[%c0_13, %c0_14, %c0_15, %c0_16], %31 {strides = array<i32>} : memref<1x4x8x128xf32, #tpu.memory_space<vmem>>, vector<1x1x8x128xf32>,
    %32 = vector.shape_cast %4 : vector<8x128xf32> to vector<1x8x128xf32>
    %cst_17 = arith.constant dense<0.000000e+00> : vector<8x128xf32>
    %33 = vector.multi_reduction <add>, %32, %cst_17 [0] : vector<1x8x128xf32> to vector<8x128xf32>
    %c0_18 = arith.constant 0 : index
    %c1 = arith.constant 1 : index
    %c0_19 = arith.constant 0 : index
    %c0_20 = arith.constant 0 : index
    %34 = vector.load %arg5[%c0_18, %c1, %c0_19, %c0_20] : memref<1x4x8x128xf32, #tpu.memory_space<vmem>>, vector<1x1x8x128xf32>
    %35 = vector.shape_cast %34 : vector<1x1x8x128xf32> to vector<8x128xf32>
    %36 = vector.shape_cast %33 : vector<8x128xf32> to vector<1x1x8x128xf32>
    tpu.vector_store %arg5[%c0_18, %c1, %c0_19, %c0_20], %36 {strides = array<i32>} : memref<1x4x8x128xf32, #tpu.memory_space<vmem>>, vector<1x1x8x128xf32>,
    %37 = vector.shape_cast %8 : vector<8x128xf32> to vector<1x8x128xf32>
    %cst_21 = arith.constant dense<0.000000e+00> : vector<8x128xf32>
    %38 = vector.multi_reduction <add>, %37, %cst_21 [0] : vector<1x8x128xf32> to vector<8x128xf32>
    %c0_22 = arith.constant 0 : index
    %c2 = arith.constant 2 : index
    %c0_23 = arith.constant 0 : index
    %c0_24 = arith.constant 0 : index
    %39 = vector.load %arg5[%c0_22, %c2, %c0_23, %c0_24] : memref<1x4x8x128xf32, #tpu.memory_space<vmem>>, vector<1x1x8x128xf32>
    %40 = vector.shape_cast %39 : vector<1x1x8x128xf32> to vector<8x128xf32>
    %41 = vector.shape_cast %38 : vector<8x128xf32> to vector<1x1x8x128xf32>
    tpu.vector_store %arg5[%c0_22, %c2, %c0_23, %c0_24], %41 {strides = array<i32>} : memref<1x4x8x128xf32, #tpu.memory_space<vmem>>, vector<1x1x8x128xf32>,
    %42 = vector.shape_cast %24 : vector<8x128xf32> to vector<1x8x128xf32>
    %cst_25 = arith.constant dense<0.000000e+00> : vector<8x128xf32>
    %43 = vector.multi_reduction <add>, %42, %cst_25 [0] : vector<1x8x128xf32> to vector<8x128xf32>
    %c0_26 = arith.constant 0 : index
    %c3 = arith.constant 3 : index
    %c0_27 = arith.constant 0 : index
    %c0_28 = arith.constant 0 : index
    %44 = vector.load %arg5[%c0_26, %c3, %c0_27, %c0_28] : memref<1x4x8x128xf32, #tpu.memory_space<vmem>>, vector<1x1x8x128xf32>
    %45 = vector.shape_cast %44 : vector<1x1x8x128xf32> to vector<8x128xf32>
    %46 = vector.shape_cast %43 : vector<8x128xf32> to vector<1x1x8x128xf32>
    tpu.vector_store %arg5[%c0_26, %c3, %c0_27, %c0_28], %46 {strides = array<i32>} : memref<1x4x8x128xf32, #tpu.memory_space<vmem>>, vector<1x1x8x128xf32>,
    return
  }
  func.func @transform_0(%arg0: i32) -> (i32, i32) {
    %c0_i32 = arith.constant 0 : i32
    %c0_i32_0 = arith.constant 0 : i32
    return %arg0, %c0_i32 : i32, i32
  }
  func.func @transform_1(%arg0: i32) -> (i32, i32) {
    %c0_i32 = arith.constant 0 : i32
    %c0_i32_0 = arith.constant 0 : i32
    return %arg0, %c0_i32 : i32, i32
  }
  func.func @transform_2(%arg0: i32) -> (i32, i32) {
    %c0_i32 = arith.constant 0 : i32
    %c0_i32_0 = arith.constant 0 : i32
    return %arg0, %c0_i32 : i32, i32
  }
  func.func @transform_3(%arg0: i32) -> (i32, i32) {
    %c0_i32 = arith.constant 0 : i32
    %c0_i32_0 = arith.constant 0 : i32
    return %arg0, %c0_i32 : i32, i32
  }
  func.func @transform_4(%arg0: i32) -> (i32, i32, i32, i32) {
    %c0_i32 = arith.constant 0 : i32
    %c0_i32_0 = arith.constant 0 : i32
    %c0_i32_1 = arith.constant 0 : i32
    %c0_i32_2 = arith.constant 0 : i32
    return %arg0, %c0_i32, %c0_i32_0, %c0_i32_1 : i32, i32, i32, i32
  }
}

</mosaic_0001>

<llo_original>
// kernel: squeeze.11
$region0: #{squeeze.11}
  %s0 = inlined_call_operand.vmem [shape: f32[2,1,16,16], index: 0, kind: input, shape index: {}]
  %s1 = inlined_call_operand.vmem [shape: f32[512], index: 1, kind: output, shape index: {}]
  $region1: #{squeeze.11} parent=0
    #allocation0 [shape = 'u8[4096]{0}', space=vmem, size = 0x1000, scoped, tag = 'scoped mem for output reshape']
    %v2 = vld [vmem:[%s0] ss:$8 sm:$0xf]
    %vm3 = vcmask 130048
    %4 = vst.msk [vmem:[#allocation0] sm:$0xf] %vm3, %v2
    %s5 = scalar_lea.vmem %s0, 7
    %v6 = vld [vmem:[%s5] ss:$8 sm:$0xf]
    %7 = vrot.lane.b32.xlu0 %v6, 112
    %v8 = vpop.permute.xlu0 %7
    %vm9 = vcmask 1048448
    %10 = vst.msk [vmem:[#allocation0] sm:$0xf] %vm9, %v8
    %s11 = scalar_lea.vmem %s0, 6
    %v12 = vld [vmem:[%s11] ss:$8 sm:$0xf]
    %13 = vrot.lane.b32.xlu0 %v12, 96
    %v14 = vpop.permute.xlu0 %13
    %vm15 = vcmask 917248
    %16 = vst.msk [vmem:[#allocation0] sm:$0xf] %vm15, %v14
    %s17 = scalar_lea.vmem %s0, 5
    %v18 = vld [vmem:[%s17] ss:$8 sm:$0xf]
    %19 = vrot.lane.b32.xlu0 %v18, 80
    %v20 = vpop.permute.xlu0 %19
    %vm21 = vcmask 786048
    %22 = vst.msk [vmem:[#allocation0] sm:$0xf] %vm21, %v20
    %s23 = scalar_lea.vmem %s0, 4
    %v24 = vld [vmem:[%s23] ss:$8 sm:$0xf]
    %25 = vrot.lane.b32.xlu0 %v24, 64
    %v26 = vpop.permute.xlu0 %25
    %vm27 = vcmask 654848
    %28 = vst.msk [vmem:[#allocation0] sm:$0xf] %vm27, %v26
    %s29 = scalar_lea.vmem %s0, 3
    %v30 = vld [vmem:[%s29] ss:$8 sm:$0xf]
    %31 = vrot.lane.b32.xlu0 %v30, 48
    %v32 = vpop.permute.xlu0 %31
    %vm33 = vcmask 523648
    %34 = vst.msk [vmem:[#allocation0] sm:$0xf] %vm33, %v32
    %s35 = scalar_lea.vmem %s0, 2
    %v36 = vld [vmem:[%s35] ss:$8 sm:$0xf]
    %37 = vrot.lane.b32.xlu0 %v36, 32
    %v38 = vpop.permute.xlu0 %37
    %vm39 = vcmask 392448
    %40 = vst.msk [vmem:[#allocation0] sm:$0xf] %vm39, %v38
    %s41 = scalar_lea.vmem %s0, 1
    %v42 = vld [vmem:[%s41] ss:$8 sm:$0xf]
    %43 = vrot.lane.b32.xlu0 %v42, 16
    %v44 = vpop.permute.xlu0 %43
    %vm45 = vcmask 261248
    %46 = vst.msk [vmem:[#allocation0] sm:$0xf] %vm45, %v44
    %s48 = ssub.s32 16, 1
    %v49 = vld [vmem:[#allocation0] sm:%s48]
    %s51 = ssub.s32 16, 1
    %52 = vst [vmem:[%s1] sm:%s51] %v49

// kernel: balance_cross_entropy_loss.1
$region0: #{balance_cross_entropy_loss.1}
  #allocation0 [shape = 'u32[]', space=smem, size = 0x4, offset = 0x4, fixed_abs, tag = 'smem constant byte address 0x4 - core index']
  #allocation1 [shape = 'u32[72,128]{1,0:T(1,128)}', space=vmem, size = 0x9000, scoped, tag = 'internal scratch']
  %s0 = inlined_call_operand.vmem [shape: f32[8,128], index: 0, kind: input, shape index: {}]
  %s1 = inlined_call_operand.vmem [shape: f32[8,128], index: 1, kind: input, shape index: {}]
  %s2 = inlined_call_operand.vmem [shape: f32[8,128], index: 2, kind: input, shape index: {}]
  %s3 = inlined_call_operand.vmem [shape: f32[8,128], index: 3, kind: output, shape index: {0}]
  %s4 = inlined_call_operand.vmem [shape: f32[1,4,8,128], index: 4, kind: output, shape index: {1}]
  %5 = xla_tuple %s3, %s4
  %s6 = sld [smem:[#allocation0]]
  $region30: #{balance_cross_entropy_loss.1} parent=0
    _
  %s8 = ssub.s32 1, %s6
  %s9 = scalar_select 0, %s8, %s6
  // Predicated region
  $region2: #{balance_cross_entropy_loss.1} parent=0 // pred_check
    _
  $region3: #{balance_cross_entropy_loss.1} parent=0 // pred_check_branch
    %11 = sbr.rel (0) target = $region5
  $region4: #{balance_cross_entropy_loss.1} parent=0 // pred_region
    _
  $region5: #{balance_cross_entropy_loss.1} parent=0 // pred_fallthru
    _
  // Predicated region
  $region6: #{balance_cross_entropy_loss.1} parent=0 // pred_check
    _
  $region7: #{balance_cross_entropy_loss.1} parent=0 // pred_check_branch
    %13 = sbr.rel (0) target = $region9
  $region8: #{balance_cross_entropy_loss.1} parent=0 // pred_region
    _
  $region9: #{balance_cross_entropy_loss.1} parent=0 // pred_fallthru
    _
  // Predicated region
  $region10: #{balance_cross_entropy_loss.1} parent=0 // pred_check
    _
  $region11: #{balance_cross_entropy_loss.1} parent=0 // pred_check_branch
    %15 = sbr.rel (0) target = $region13
  $region12: #{balance_cross_entropy_loss.1} parent=0 // pred_region
    _
  $region13: #{balance_cross_entropy_loss.1} parent=0 // pred_fallthru
    _
  %v16 = vld [vmem:[%s0] sm:$0xff]
  %v17 = vld [vmem:[%s1] sm:$0xff]
  %v18 = vld [vmem:[%s2] sm:$0xff]
  %v19 = vmul.f32 %v17, %v18
  %v20 = vfloor.f32 %v19
  %v21 = vsub.f32 1.0, %v17
  %v22 = vmul.f32 %v21, %v18
  %v23 = vfloor.f32 %v22
  %v24 = vlog2.pop %v16
  %v25 = vmul.f32 %v24, 0.6931472
  %v26 = vmax.f32 %v25, -100.0
  %v27 = vsub.f32 1.0, %v16
  %v28 = vlog2.pop %v27
  %v29 = vmul.f32 %v28, 0.6931472
  %v30 = vmax.f32 %v29, -100.0
  %v31 = vmul.f32 %v17, %v26
  %v32 = vmul.f32 %v21, %v30
  %v33 = vadd.f32 %v31, %v32
  %v34 = vsub.f32 0.0, %v33
  %v35 = vmul.f32 %v34, %v23
  %36 = vst [vmem:[%s3] sm:$0xff] %v35
  %v37 = vmul.f32 %v34, %v20
  %v38 = vadd.f32 %v37, 0.0
  %39 = vst [vmem:[%s4] sm:$0xff] %v38
  %v40 = vadd.f32 %v20, 0.0
  %s41 = scalar_lea.vmem %s4, 8
  %42 = vst [vmem:[%s41] sm:$0xff] %v40
  %v43 = vadd.f32 %v23, 0.0
  %s44 = scalar_lea.vmem %s4, 16
  %45 = vst [vmem:[%s44] sm:$0xff] %v43
  %v46 = vadd.f32 %v35, 0.0
  %s47 = scalar_lea.vmem %s4, 24
  %48 = vst [vmem:[%s47] sm:$0xff] %v46
  // Predicated region
  $region14: #{balance_cross_entropy_loss.1} parent=0 // pred_check
    _
  $region15: #{balance_cross_entropy_loss.1} parent=0 // pred_check_branch
    %50 = sbr.rel (0) target = $region17
  $region16: #{balance_cross_entropy_loss.1} parent=0 // pred_region
    _
  $region17: #{balance_cross_entropy_loss.1} parent=0 // pred_fallthru
    _
  // Predicated region
  $region18: #{balance_cross_entropy_loss.1} parent=0 // pred_check
    _
  $region19: #{balance_cross_entropy_loss.1} parent=0 // pred_check_branch
    %52 = sbr.rel (0) target = $region21
  $region20: #{balance_cross_entropy_loss.1} parent=0 // pred_region
    _
  $region21: #{balance_cross_entropy_loss.1} parent=0 // pred_fallthru
    _
  // Predicated region
  $region22: #{balance_cross_entropy_loss.1} parent=0 // pred_check
    _
  $region23: #{balance_cross_entropy_loss.1} parent=0 // pred_check_branch
    %54 = sbr.rel (0) target = $region25
  $region24: #{balance_cross_entropy_loss.1} parent=0 // pred_region
    _
  $region25: #{balance_cross_entropy_loss.1} parent=0 // pred_fallthru
    _
  // Predicated region
  $region26: #{balance_cross_entropy_loss.1} parent=0 // pred_check
    _
  $region27: #{balance_cross_entropy_loss.1} parent=0 // pred_check_branch
    %56 = sbr.rel (0) target = $region29
  $region28: #{balance_cross_entropy_loss.1} parent=0 // pred_region
    _
  $region29: #{balance_cross_entropy_loss.1} parent=0 // pred_fallthru
    _

// kernel: closed_call.11
$region0: #{closed_call.11}
  #allocation0 [shape = 'u32[]', space=smem, size = 0x4, offset = 0x4, fixed_abs, tag = 'smem constant byte address 0x4 - core index']
  #allocation1 [shape = 'u32[72,128]{1,0:T(1,128)}', space=vmem, size = 0x9000, scoped, tag = 'internal scratch']
  #allocation2 [shape = 'f32[8,128]{1,0:T(8,128)}', space=vmem, size = 0x1000, scoped, tag = 'scratch operand']
  #allocation3 [shape = 'f32[8,128]{1,0:T(8,128)}', space=vmem, size = 0x1000, scoped, tag = 'scratch operand']
  #allocation4 [shape = 's32[1]{0}', space=sflag, size = 0x4, scoped, tag = 'scoped memory for closed_call.11']
  #allocation5 [shape = 's32[1]{0:T(128)S(6)}', space=smem, size = 0x200, scoped, tag = 'prefetched SMEM operand 0']
  %s0 = inlined_call_operand.<no memory space> [shape: s32[1], index: 0, kind: input, shape index: {}]
  %s1 = inlined_call_operand.vmem [shape: f32[8,128], index: 1, kind: input, shape index: {}]
  %s2 = inlined_call_operand.vmem [shape: f32[2], index: 2, kind: output, shape index: {}]
  %s3 = sld [smem:[#allocation0]]
  $region22: #{closed_call.11} parent=0
    _
  %s5 = ssub.s32 1, %s3
  %s6 = scalar_select 0, %s5, %s3
  %7 = sst [smem:[#allocation5]] %s0
  $region1: #{closed_call.11} parent=0
    #allocation6 [shape = 'u8[512]{0}', space=smem, size = 0x200, scoped, tag = 'output window, operand 0, single buffered']
    #allocation7 [shape = 's32[1]{0}', space=sflag, size = 0x4, scoped, tag = 'scoped memory for closed_call.11']
    %8 = vsyncpa [#allocation7], 0
    // Predicated region
    $region2: #{closed_call.11} parent=1 // pred_check
      _
    $region3: #{closed_call.11} parent=1 // pred_check_branch
      %10 = sbr.rel (0) target = $region5
    $region4: #{closed_call.11} parent=1 // pred_region
      _
    $region5: #{closed_call.11} parent=1 // pred_fallthru
      _
    %p11 = scmp.eq.s32.totalorder 0, 0
    // Predicated region
    $region6: #{closed_call.11} parent=1 // pred_check
      %p12 = pneg %p11
    $region7: #{closed_call.11} parent=1 // pred_check_branch
      %14 = sbr.rel (%p12) target = $region9
    $region8: #{closed_call.11} parent=1 // pred_region
      %15 = vst [vmem:[#allocation2] sm:$0xff] 0.0
      %16 = vst [vmem:[#allocation3] sm:$0xff] 0.0
    $region9: #{closed_call.11} parent=1 // pred_fallthru
      _
    %v17 = vld [vmem:[%s1] sm:$0xff]
    %s19 = sld [smem:[#allocation5]]
    %v20 = vstv %s19
    %vm21 = vcmp.ge.s32.totalorder %v17, %v20
    %v22 = vld [vmem:[#allocation2] sm:$0xff]
    %v23 = vsel %vm21, 1.0, 0.0
    %v24 = vadd.f32 %v23, 0.0
    %v25 = vadd.f32 %v22, %v24
    %26 = vst [vmem:[#allocation2] sm:$0xff] %v25
    %v27 = vld [vmem:[#allocation3] sm:$0xff]
    %v28 = vsel %vm21, %v17, 0.0
    %v29 = vadd.f32 %v28, 0.0
    %v30 = vadd.f32 %v27, %v29
    %31 = vst [vmem:[#allocation3] sm:$0xff] %v30
    // Predicated region
    $region10: #{closed_call.11} parent=1 // pred_check
      %p32 = pneg %p11
    $region11: #{closed_call.11} parent=1 // pred_check_branch
      %34 = sbr.rel (%p32) target = $region13
    $region12: #{closed_call.11} parent=1 // pred_region
      %v35 = vld [vmem:[#allocation2] sm:$0xff]
      %36 = vadd.xlane.f32.xlu0 %v35
      %v37 = vpop.xlane.xlu0 %36
      %v38 = vrot.slane %v37, 4
      %v39 = vadd.f32 %v37, %v38
      %v40 = vrot.slane %v39, 2
      %v41 = vadd.f32 %v39, %v40
      %v42 = vrot.slane %v41, 1
      %v43 = vadd.f32 %v41, %v42
      %s44 = vtos %v43
      %s45 = scalar_lea.smem [#allocation6], 0
      %46 = sst [smem:[%s45]] %s44
      %v47 = vld [vmem:[#allocation3] sm:$0xff]
      %48 = vadd.xlane.f32.xlu0 %v47
      %v49 = vpop.xlane.xlu0 %48
      %v50 = vrot.slane %v49, 4
      %v51 = vadd.f32 %v49, %v50
      %v52 = vrot.slane %v51, 2
      %v53 = vadd.f32 %v51, %v52
      %v54 = vrot.slane %v53, 1
      %v55 = vadd.f32 %v53, %v54
      %s56 = vtos %v55
      %s57 = scalar_lea.smem [#allocation6], 1
      %58 = sst [smem:[%s57]] %s56
    $region13: #{closed_call.11} parent=1 // pred_fallthru
      _
    // Predicated region
    $region14: #{closed_call.11} parent=1 // pred_check
      _
    $region15: #{closed_call.11} parent=1 // pred_check_branch
      %60 = sbr.rel (0) target = $region17
    $region16: #{closed_call.11} parent=1 // pred_region
      %62 = vsyncadd [#allocation7], 0
      %s64 = sshll.u32 %s2, 4
      %s65 = int_to_ptr.vmem [resolvable:$true] %s64
      %67 = dma.smem_to_vmem [#allocation6], 16, %s65, [#allocation7]
    $region17: #{closed_call.11} parent=1 // pred_fallthru
      _
    // Predicated region
    $region18: #{closed_call.11} parent=1 // pred_check
      _
    $region19: #{closed_call.11} parent=1 // pred_check_branch
      %69 = sbr.rel (0) target = $region21
    $region20: #{closed_call.11} parent=1 // pred_region
      %71 = dma.done [#allocation7], 16
    $region21: #{closed_call.11} parent=1 // pred_fallthru
      _
    %72 = sfence
    %73 = vsyncpa [#allocation7], 1

</llo_original>
